<compile_context>
chip_gen: v7x
topology: tpu7x:2x2x1
jax: 0.10.0
libtpu: 0.0.40
codegen_flags: <defaults>
</compile_context>

<pallas_src>
import functools

import jax
import jax.numpy as jnp
from jax import lax
from jax.experimental import pallas as pl
from jax.experimental.pallas import tpu as pltpu

EPSILON = 1e-12         # matches ScaledCELoss.EPSILON
LANES = 128             # vreg lane width
SUBLANES = 8            # f32 vreg sublane count
MAX_TILE_ROWS = 1024    # rows of 128 lanes per grid step (512 KiB f32 per input)
SIG_CLAMP = 60.0        # |z| > 60 is already fully saturated at f32 + eps precision


def _round_up(x, m):
    return ((x + m - 1) // m) * m


def _num_tensorcores():
    """2 on dual-TensorCore chips (v7x); 1 on single-TC v5e/v6e."""
    try:
        kind = jax.devices()[0].device_kind.lower()
    except Exception:
        return 1
    return 2 if ("v7" in kind or "7x" in kind) else 1


def _sigmoid(z):
    # z is pre-clamped to [-SIG_CLAMP, SIG_CLAMP]; exp never overflows and the
    # explicit form avoids backend-specific logistic lowering at extreme args.
    return 1.0 / (1.0 + jnp.exp(-z))


def _tree_partial_sum(elem, block_rows):
    # Reduce (block_rows, 128) -> (8, 128) with a balanced pairwise tree of
    # sublane-aligned VALU adds (log depth; no serial dependency chain, no XLU).
    parts = [elem[i * SUBLANES:(i + 1) * SUBLANES, :]
             for i in range(block_rows // SUBLANES)]
    while len(parts) > 1:
        nxt = [parts[i] + parts[i + 1] for i in range(0, len(parts) - 1, 2)]
        if len(parts) % 2 == 1:
            nxt.append(parts[-1])
        parts = nxt
    return parts[0]


def _scaled_ce_kernel(pred_ref, cp_ref, res_ref, out_ref, *,
                      lambda_, pred_scale, inv_cp_scaling,
                      n_valid, block_rows, steps, need_mask):
    s = pl.program_id(1)

    @pl.when(s == 0)
    def _init():
        out_ref[...] = jnp.zeros_like(out_ref)

    pred = pred_ref[...].astype(jnp.float32)
    cp = cp_ref[...].astype(jnp.float32)
    result = res_ref[...].astype(jnp.float32)

    z_pred = jnp.clip(pred * pred_scale, -SIG_CLAMP, SIG_CLAMP)
    z_cp = jnp.clip(cp * inv_cp_scaling, -SIG_CLAMP, SIG_CLAMP)
    wdl_pred = _sigmoid(z_pred)
    wdl_cp = _sigmoid(z_cp)
    wdl_target = lambda_ * wdl_cp + (1.0 - lambda_) * result

    # Target entropy minus cross entropy, element-wise (original eps formulation).
    elem = (wdl_target * jnp.log(wdl_target + EPSILON)
            + (1.0 - wdl_target) * jnp.log(1.0 - wdl_target + EPSILON)
            - (wdl_target * jnp.log(wdl_pred + EPSILON)
               + (1.0 - wdl_target) * jnp.log(1.0 - wdl_pred + EPSILON)))

    # Unmasked partial sum (used by every full block).
    part_full = _tree_partial_sum(elem, block_rows)

    if not need_mask:
        out_ref[...] += part_full
    else:
        c = pl.program_id(0)
        block_elems = block_rows * LANES
        start = (c * steps + s) * block_elems
        block_is_full = start + block_elems <= n_valid

        @pl.when(block_is_full)
        def _fast_path():
            out_ref[...] += part_full

        @pl.when(jnp.logical_not(block_is_full))
        def _tail_path():
            # Only the block containing the batch boundary (and any fully padded
            # blocks) pays for the iotas + compare + select.
            row_i = lax.broadcasted_iota(jnp.int32, (block_rows, LANES), 0)
            col_i = lax.broadcasted_iota(jnp.int32, (block_rows, LANES), 1)
            flat = start + row_i * LANES + col_i
            masked = jnp.where(flat < n_valid, elem, 0.0)
            out_ref[...] += _tree_partial_sum(masked, block_rows)


def scaled_ce_loss(pred, cp, result, *, lambda_, nnue_2_score, cp_scaling):
    """pred, cp, result: (B, 1) arrays (PyTorch convention). Returns the scalar mean loss."""
    pred = pred.reshape(-1)
    cp = cp.reshape(-1)
    result = result.reshape(-1)
    n = pred.shape[0]

    rows = -(-n // LANES)  # ceil(n / 128)
    num_tc = _num_tensorcores()
    if num_tc >= 2 and rows >= 2 * MAX_TILE_ROWS:
        splits, block_rows = 2, MAX_TILE_ROWS
    else:
        splits, block_rows = 1, min(MAX_TILE_ROWS, _round_up(rows, SUBLANES))
    rows_padded = _round_up(rows, splits * block_rows)
    steps = rows_padded // (splits * block_rows)
    n_padded = rows_padded * LANES
    need_mask = (n_padded != n)

    def to_slab(x):
        x = x.astype(jnp.float32)
        if need_mask:
            x = jnp.pad(x, (0, n_padded - n))
        return x.reshape(rows_padded, LANES)

    pred2, cp2, res2 = to_slab(pred), to_slab(cp), to_slab(result)

    kernel = functools.partial(
        _scaled_ce_kernel,
        lambda_=float(lambda_),
        pred_scale=float(nnue_2_score) / float(cp_scaling),
        inv_cp_scaling=1.0 / float(cp_scaling),
        n_valid=int(n),
        block_rows=block_rows,
        steps=steps,
        need_mask=need_mask,
    )

    in_spec = pl.BlockSpec((block_rows, LANES), lambda c, s: (c * steps + s, 0))
    out_spec = pl.BlockSpec((SUBLANES, LANES), lambda c, s: (c, 0))

    if splits >= 2:
        # Dual-TensorCore chips: actually shard the leading axis across cores.
        dim_sems = (pltpu.CORE_PARALLEL, pltpu.ARBITRARY)
    else:
        dim_sems = ("arbitrary", "arbitrary")

    partial_sums = pl.pallas_call(
        kernel,
        out_shape=jax.ShapeDtypeStruct((splits * SUBLANES, LANES), jnp.float32),
        grid_spec=pltpu.PrefetchScalarGridSpec(
            num_scalar_prefetch=0,
            grid=(splits, steps),
            in_specs=[in_spec, in_spec, in_spec],
            out_specs=out_spec,
        ),
        compiler_params=pltpu.CompilerParams(
            dimension_semantics=dim_sems,
            vmem_limit_bytes=32 * 1024 * 1024,
            allow_input_fusion=[True, True, True],
        ),
        cost_estimate=pl.CostEstimate(
            flops=25 * n,
            transcendentals=6 * n,
            bytes_accessed=12 * n,
        ),
    )(pred2, cp2, res2)

    # Single tiny cross-lane reduction + mean normalization outside the kernel.
    return jnp.sum(partial_sums) / float(n)


def scaled_ce_loss_ref(pred, cp, result, *, lambda_, nnue_2_score, cp_scaling):
    """Literal JAX translation of the PyTorch module (reference)."""
    pred = pred.astype(jnp.float32)
    cp = cp.astype(jnp.float32)
    result = result.astype(jnp.float32)
    wdl_pred = jax.nn.sigmoid(pred * nnue_2_score / cp_scaling)
    wdl_cp = jax.nn.sigmoid(cp / cp_scaling)
    wdl_target = lambda_ * wdl_cp + (1.0 - lambda_) * result
    return jnp.mean(
        wdl_target * jnp.log(wdl_target + EPSILON)
        + (1.0 - wdl_target) * jnp.log(1.0 - wdl_target + EPSILON)
        - (wdl_target * jnp.log(wdl_pred + EPSILON)
           + (1.0 - wdl_target) * jnp.log(1.0 - wdl_pred + EPSILON)))


if __name__ == "__main__":
    # Module hyperparameters (deterministic, in-script).
    lambda_ = 0.75
    nnue_2_score = 600
    cp_scaling = 361

    key = jax.random.PRNGKey(0)

    def make_batch(k, B):
        k1, k2, k3 = jax.random.split(k, 3)
        pred = jax.random.normal(k1, (B, 1), dtype=jnp.float32) * 2.0        # raw NNUE output
        cp = jax.random.normal(k2, (B, 1), dtype=jnp.float32) * 300.0        # centipawn eval
        result = jax.random.randint(k3, (B, 1), 0, 3).astype(jnp.float32) * 0.5  # {0, 0.5, 1}
        return pred, cp, result

    k_ragged, k_even = jax.random.split(key)
    # B=2000 exercises the pad + tail-mask path; B=1024 exercises the unmasked fast path.
    for kk, B in ((k_ragged, 2000), (k_even, 1024)):
        pred, cp, result = make_batch(kk, B)
        loss = scaled_ce_loss(pred, cp, result,
                              lambda_=lambda_, nnue_2_score=nnue_2_score,
                              cp_scaling=cp_scaling)
        loss = jax.block_until_ready(loss)
        ref = scaled_ce_loss_ref(pred, cp, result,
                                 lambda_=lambda_, nnue_2_score=nnue_2_score,
                                 cp_scaling=cp_scaling)
        assert jnp.allclose(loss, ref, rtol=5e-4, atol=1e-5), (B, loss, ref)

    print("KERNEL_OK")
</pallas_src>

<mosaic_0001>
module attributes {stable_mosaic.version = 11 : i64} {
  func.func @_scaled_ce_kernel(%arg0: i32, %arg1: i32, %arg2: memref<16x128xf32, #tpu.memory_space<vmem>>, %arg3: memref<16x128xf32, #tpu.memory_space<vmem>>, %arg4: memref<16x128xf32, #tpu.memory_space<vmem>>, %arg5: memref<8x128xf32, #tpu.memory_space<vmem>>) attributes {dimension_semantics = [#tpu.dimension_semantics<arbitrary>, #tpu.dimension_semantics<arbitrary>], iteration_bounds = array<i64: 1, 1>, scalar_prefetch = 0 : i64, scratch_operands = 0 : i64, tpu.core_type = #tpu.core_type<tc>, window_params = [{transform_indices = @transform_0, window_bounds = array<i64: 16, 128>}, {transform_indices = @transform_1, window_bounds = array<i64: 16, 128>}, {transform_indices = @transform_2, window_bounds = array<i64: 16, 128>}, {transform_indices = @transform_3, window_bounds = array<i64: 8, 128>}]} {
    %c0_i32 = arith.constant 0 : i32
    %0 = arith.cmpi eq, %arg1, %c0_i32 : i32
    %1 = arith.extui %0 : i1 to i32
    %c0_i32_0 = arith.constant 0 : i32
    %2 = arith.cmpi ne, %1, %c0_i32_0 : i32
    scf.if %2 {
      %cst_30 = arith.constant 0.000000e+00 : f32
      %77 = vector.broadcast %cst_30 : f32 to vector<8x128xf32>
      %c0_31 = arith.constant 0 : index
      %c0_32 = arith.constant 0 : index
      %78 = vector.load %arg5[%c0_31, %c0_32] : memref<8x128xf32, #tpu.memory_space<vmem>>, vector<8x128xf32>
      tpu.vector_store %arg5[%c0_31, %c0_32], %77 {strides = array<i32>} : memref<8x128xf32, #tpu.memory_space<vmem>>, vector<8x128xf32>,
    } else {
    }
    %c0 = arith.constant 0 : index
    %c0_1 = arith.constant 0 : index
    %3 = vector.load %arg2[%c0, %c0_1] : memref<16x128xf32, #tpu.memory_space<vmem>>, vector<16x128xf32>
    %c0_2 = arith.constant 0 : index
    %c0_3 = arith.constant 0 : index
    %4 = vector.load %arg3[%c0_2, %c0_3] : memref<16x128xf32, #tpu.memory_space<vmem>>, vector<16x128xf32>
    %c0_4 = arith.constant 0 : index
    %c0_5 = arith.constant 0 : index
    %5 = vector.load %arg4[%c0_4, %c0_5] : memref<16x128xf32, #tpu.memory_space<vmem>>, vector<16x128xf32>
    %cst = arith.constant 1.66204989 : f32
    %6 = vector.broadcast %cst : f32 to vector<16x128xf32>
    %7 = arith.mulf %3, %6 : vector<16x128xf32>
    %cst_6 = arith.constant -6.000000e+01 : f32
    %cst_7 = arith.constant 6.000000e+01 : f32
    %8 = vector.broadcast %cst_6 : f32 to vector<16x128xf32>
    %9 = arith.maximumf %8, %7 : vector<16x128xf32>
    %10 = vector.broadcast %cst_7 : f32 to vector<16x128xf32>
    %11 = arith.minimumf %10, %9 : vector<16x128xf32>
    %cst_8 = arith.constant 0.00277008303 : f32
    %12 = vector.broadcast %cst_8 : f32 to vector<16x128xf32>
    %13 = arith.mulf %4, %12 : vector<16x128xf32>
    %cst_9 = arith.constant -6.000000e+01 : f32
    %cst_10 = arith.constant 6.000000e+01 : f32
    %14 = vector.broadcast %cst_9 : f32 to vector<16x128xf32>
    %15 = arith.maximumf %14, %13 : vector<16x128xf32>
    %16 = vector.broadcast %cst_10 : f32 to vector<16x128xf32>
    %17 = arith.minimumf %16, %15 : vector<16x128xf32>
    %cst_11 = arith.constant 0.000000e+00 : f32
    %18 = vector.broadcast %cst_11 : f32 to vector<16x128xf32>
    %19 = arith.subf %18, %11 : vector<16x128xf32>
    %20 = math.exp %19 : vector<16x128xf32>
    %cst_12 = arith.constant 1.000000e+00 : f32
    %21 = vector.broadcast %cst_12 : f32 to vector<16x128xf32>
    %22 = arith.addf %21, %20 : vector<16x128xf32>
    %cst_13 = arith.constant 1.000000e+00 : f32
    %23 = vector.broadcast %cst_13 : f32 to vector<16x128xf32>
    %24 = arith.divf %23, %22 : vector<16x128xf32>
    %cst_14 = arith.constant 0.000000e+00 : f32
    %25 = vector.broadcast %cst_14 : f32 to vector<16x128xf32>
    %26 = arith.subf %25, %17 : vector<16x128xf32>
    %27 = math.exp %26 : vector<16x128xf32>
    %cst_15 = arith.constant 1.000000e+00 : f32
    %28 = vector.broadcast %cst_15 : f32 to vector<16x128xf32>
    %29 = arith.addf %28, %27 : vector<16x128xf32>
    %cst_16 = arith.constant 1.000000e+00 : f32
    %30 = vector.broadcast %cst_16 : f32 to vector<16x128xf32>
    %31 = arith.divf %30, %29 : vector<16x128xf32>
    %cst_17 = arith.constant 7.500000e-01 : f32
    %32 = vector.broadcast %cst_17 : f32 to vector<16x128xf32>
    %33 = arith.mulf %32, %31 : vector<16x128xf32>
    %cst_18 = arith.constant 2.500000e-01 : f32
    %34 = vector.broadcast %cst_18 : f32 to vector<16x128xf32>
    %35 = arith.mulf %34, %5 : vector<16x128xf32>
    %36 = arith.addf %33, %35 : vector<16x128xf32>
    %cst_19 = arith.constant 9.99999996E-13 : f32
    %37 = vector.broadcast %cst_19 : f32 to vector<16x128xf32>
    %38 = arith.addf %36, %37 : vector<16x128xf32>
    %39 = math.log %38 : vector<16x128xf32>
    %40 = arith.mulf %36, %39 : vector<16x128xf32>
    %cst_20 = arith.constant 1.000000e+00 : f32
    %41 = vector.broadcast %cst_20 : f32 to vector<16x128xf32>
    %42 = arith.subf %41, %36 : vector<16x128xf32>
    %cst_21 = arith.constant 1.000000e+00 : f32
    %43 = vector.broadcast %cst_21 : f32 to vector<16x128xf32>
    %44 = arith.subf %43, %36 : vector<16x128xf32>
    %cst_22 = arith.constant 9.99999996E-13 : f32
    %45 = vector.broadcast %cst_22 : f32 to vector<16x128xf32>
    %46 = arith.addf %44, %45 : vector<16x128xf32>
    %47 = math.log %46 : vector<16x128xf32>
    %48 = arith.mulf %42, %47 : vector<16x128xf32>
    %49 = arith.addf %40, %48 : vector<16x128xf32>
    %cst_23 = arith.constant 9.99999996E-13 : f32
    %50 = vector.broadcast %cst_23 : f32 to vector<16x128xf32>
    %51 = arith.addf %24, %50 : vector<16x128xf32>
    %52 = math.log %51 : vector<16x128xf32>
    %53 = arith.mulf %36, %52 : vector<16x128xf32>
    %cst_24 = arith.constant 1.000000e+00 : f32
    %54 = vector.broadcast %cst_24 : f32 to vector<16x128xf32>
    %55 = arith.subf %54, %36 : vector<16x128xf32>
    %cst_25 = arith.constant 1.000000e+00 : f32
    %56 = vector.broadcast %cst_25 : f32 to vector<16x128xf32>
    %57 = arith.subf %56, %24 : vector<16x128xf32>
    %cst_26 = arith.constant 9.99999996E-13 : f32
    %58 = vector.broadcast %cst_26 : f32 to vector<16x128xf32>
    %59 = arith.addf %57, %58 : vector<16x128xf32>
    %60 = math.log %59 : vector<16x128xf32>
    %61 = arith.mulf %55, %60 : vector<16x128xf32>
    %62 = arith.addf %53, %61 : vector<16x128xf32>
    %63 = arith.subf %49, %62 : vector<16x128xf32>
    %64 = vector.extract_strided_slice %63 {offsets = [0, 0], sizes = [8, 128], strides = [1, 1]} : vector<16x128xf32> to vector<8x128xf32>
    %65 = vector.extract_strided_slice %63 {offsets = [8, 0], sizes = [8, 128], strides = [1, 1]} : vector<16x128xf32> to vector<8x128xf32>
    %66 = arith.addf %64, %65 : vector<8x128xf32>
    %c1_i32 = arith.constant 1 : i32
    %67 = arith.muli %arg0, %c1_i32 : i32
    %68 = arith.addi %67, %arg1 : i32
    %c2048_i32 = arith.constant 2048 : i32
    %69 = arith.muli %68, %c2048_i32 : i32
    %c2048_i32_27 = arith.constant 2048 : i32
    %70 = arith.addi %69, %c2048_i32_27 : i32
    %c2000_i32 = arith.constant 2000 : i32
    %71 = arith.cmpi sle, %70, %c2000_i32 : i32
    %72 = arith.extui %71 : i1 to i32
    %c0_i32_28 = arith.constant 0 : i32
    %73 = arith.cmpi ne, %72, %c0_i32_28 : i32
    scf.if %73 {
      %c0_30 = arith.constant 0 : index
      %c0_31 = arith.constant 0 : index
      %77 = vector.load %arg5[%c0_30, %c0_31] : memref<8x128xf32, #tpu.memory_space<vmem>>, vector<8x128xf32>
      %78 = arith.addf %77, %66 : vector<8x128xf32>
      %c0_32 = arith.constant 0 : index
      %c0_33 = arith.constant 0 : index
      %79 = vector.load %arg5[%c0_32, %c0_33] : memref<8x128xf32, #tpu.memory_space<vmem>>, vector<8x128xf32>
      tpu.vector_store %arg5[%c0_32, %c0_33], %78 {strides = array<i32>} : memref<8x128xf32, #tpu.memory_space<vmem>>, vector<8x128xf32>,
    } else {
    }
    %true = arith.constant true
    %74 = arith.xori %71, %true : i1
    %75 = arith.extui %74 : i1 to i32
    %c0_i32_29 = arith.constant 0 : i32
    %76 = arith.cmpi ne, %75, %c0_i32_29 : i32
    scf.if %76 {
      %77 = tpu.iota {dimensions = array<i32: 0>} : vector<16x128xi32>
      %78 = tpu.iota {dimensions = array<i32: 1>} : vector<16x128xi32>
      %c128_i32 = arith.constant 128 : i32
      %79 = vector.broadcast %c128_i32 : i32 to vector<16x128xi32>
      %80 = arith.muli %77, %79 : vector<16x128xi32>
      %81 = vector.broadcast %69 : i32 to vector<16x128xi32>
      %82 = arith.addi %81, %80 : vector<16x128xi32>
      %83 = arith.addi %82, %78 : vector<16x128xi32>
      %c2000_i32_30 = arith.constant 2000 : i32
      %84 = vector.broadcast %c2000_i32_30 : i32 to vector<16x128xi32>
      %85 = arith.cmpi slt, %83, %84 : vector<16x128xi32>
      %cst_31 = arith.constant 0.000000e+00 : f32
      %86 = vector.broadcast %cst_31 : f32 to vector<16x128xf32>
      %87 = arith.select %85, %63, %86 : vector<16x128xi1>, vector<16x128xf32>
      %c0_32 = arith.constant 0 : index
      %c0_33 = arith.constant 0 : index
      %88 = vector.load %arg5[%c0_32, %c0_33] : memref<8x128xf32, #tpu.memory_space<vmem>>, vector<8x128xf32>
      %89 = vector.extract_strided_slice %87 {offsets = [0, 0], sizes = [8, 128], strides = [1, 1]} : vector<16x128xf32> to vector<8x128xf32>
      %90 = vector.extract_strided_slice %87 {offsets = [8, 0], sizes = [8, 128], strides = [1, 1]} : vector<16x128xf32> to vector<8x128xf32>
      %91 = arith.addf %89, %90 : vector<8x128xf32>
      %92 = arith.addf %88, %91 : vector<8x128xf32>
      %c0_34 = arith.constant 0 : index
      %c0_35 = arith.constant 0 : index
      %93 = vector.load %arg5[%c0_34, %c0_35] : memref<8x128xf32, #tpu.memory_space<vmem>>, vector<8x128xf32>
      tpu.vector_store %arg5[%c0_34, %c0_35], %92 {strides = array<i32>} : memref<8x128xf32, #tpu.memory_space<vmem>>, vector<8x128xf32>,
    } else {
    }
    return
  }
  func.func @transform_0(%arg0: i32, %arg1: i32) -> (i32, i32) {
    %c1_i32 = arith.constant 1 : i32
    %0 = arith.muli %arg0, %c1_i32 : i32
    %1 = arith.addi %0, %arg1 : i32
    %c0_i32 = arith.constant 0 : i32
    %c0_i32_0 = arith.constant 0 : i32
    return %1, %c0_i32 : i32, i32
  }
  func.func @transform_1(%arg0: i32, %arg1: i32) -> (i32, i32) {
    %c1_i32 = arith.constant 1 : i32
    %0 = arith.muli %arg0, %c1_i32 : i32
    %1 = arith.addi %0, %arg1 : i32
    %c0_i32 = arith.constant 0 : i32
    %c0_i32_0 = arith.constant 0 : i32
    return %1, %c0_i32 : i32, i32
  }
  func.func @transform_2(%arg0: i32, %arg1: i32) -> (i32, i32) {
    %c1_i32 = arith.constant 1 : i32
    %0 = arith.muli %arg0, %c1_i32 : i32
    %1 = arith.addi %0, %arg1 : i32
    %c0_i32 = arith.constant 0 : i32
    %c0_i32_0 = arith.constant 0 : i32
    return %1, %c0_i32 : i32, i32
  }
  func.func @transform_3(%arg0: i32, %arg1: i32) -> (i32, i32) {
    %c0_i32 = arith.constant 0 : i32
    %c0_i32_0 = arith.constant 0 : i32
    return %arg0, %c0_i32 : i32, i32
  }
}

</mosaic_0001>

<llo_original>
// kernel: tpu_custom_call.1
$region0: #{tpu_custom_call.1}
  #allocation0 [shape = 'u32[]', space=smem, size = 0x4, offset = 0x4, fixed_abs, tag = 'smem constant byte address 0x4 - core index']
  #allocation1 [shape = 'u32[144,128]{1,0:T(1,128)}', space=vmem, size = 0x12000, scoped, tag = 'internal scratch']
  %s0 = inlined_call_operand.hbm [shape: f32[16,128], index: 0, kind: input, shape index: {}]
  %s1 = inlined_call_operand.hbm [shape: f32[16,128], index: 1, kind: input, shape index: {}]
  %s2 = inlined_call_operand.hbm [shape: f32[16,128], index: 2, kind: input, shape index: {}]
  %s3 = inlined_call_operand.hbm [shape: f32[8,128], index: 3, kind: output, shape index: {}]
  %s4 = sld [smem:[#allocation0]]
  $region46: #{tpu_custom_call.1} parent=0
    _
  %s6 = ssub.s32 1, %s4
  %s7 = scalar_select 0, %s6, %s4
  $region1: #{tpu_custom_call.1} parent=0
    #allocation2 [shape = 'u8[8192]{0}', space=vmem, size = 0x2000, scoped, tag = 'input window, operand 0, single buffered']
    #allocation3 [shape = 's32[1]{0}', space=sflag, size = 0x4, scoped, tag = 'scoped memory for tpu_custom_call.1']
    #allocation4 [shape = 's32[1]{0}', space=sflag, size = 0x4, scoped, tag = 'scoped memory for tpu_custom_call.1']
    #allocation5 [shape = 'u8[8192]{0}', space=vmem, size = 0x2000, scoped, tag = 'input window, operand 1, single buffered']
    #allocation6 [shape = 's32[1]{0}', space=sflag, size = 0x4, scoped, tag = 'scoped memory for tpu_custom_call.1']
    #allocation7 [shape = 'u8[8192]{0}', space=vmem, size = 0x2000, scoped, tag = 'input window, operand 2, single buffered']
    #allocation8 [shape = 'u8[4096]{0}', space=vmem, size = 0x1000, scoped, tag = 'output window, operand 0, single buffered']
    %8 = vsyncpa [#allocation3], 0
    %9 = vsyncpa [#allocation6], 0
    %10 = vsyncpa [#allocation4], 0
    // Predicated region
    $region2: #{tpu_custom_call.1} parent=1 // pred_check
      _
    $region3: #{tpu_custom_call.1} parent=1 // pred_check_branch
      %12 = sbr.rel (0) target = $region5
    $region4: #{tpu_custom_call.1} parent=1 // pred_region
      %s13 = sadd.s32 0, 0
      %s14 = smul.u32 2, %s13
      %s16 = ssub.s32 256, 256
      %17 = vsyncadd [#allocation3], %s16
      %s18 = smul.addr %s14, 128
      %s19 = scalar_lea.hbm %s0, %s18
      %s20 = sshll.u32 [#allocation2], 4
      %s21 = int_to_ptr.vmem [resolvable:$true] %s20
      %26 = dma.hbm_to_vmem [thread:$0]  %s19, 256, %s21, [#allocation3], 128, 128, 8
    $region5: #{tpu_custom_call.1} parent=1 // pred_fallthru
      _
    // Predicated region
    $region6: #{tpu_custom_call.1} parent=1 // pred_check
      _
    $region7: #{tpu_custom_call.1} parent=1 // pred_check_branch
      %28 = sbr.rel (0) target = $region9
    $region8: #{tpu_custom_call.1} parent=1 // pred_region
      %s29 = sadd.s32 0, 0
      %s30 = smul.u32 2, %s29
      %s32 = ssub.s32 256, 256
      %33 = vsyncadd [#allocation6], %s32
      %s34 = smul.addr %s30, 128
      %s35 = scalar_lea.hbm %s1, %s34
      %s36 = sshll.u32 [#allocation5], 4
      %s37 = int_to_ptr.vmem [resolvable:$true] %s36
      %42 = dma.hbm_to_vmem [thread:$0]  %s35, 256, %s37, [#allocation6], 128, 128, 8
    $region9: #{tpu_custom_call.1} parent=1 // pred_fallthru
      _
    // Predicated region
    $region10: #{tpu_custom_call.1} parent=1 // pred_check
      _
    $region11: #{tpu_custom_call.1} parent=1 // pred_check_branch
      %44 = sbr.rel (0) target = $region13
    $region12: #{tpu_custom_call.1} parent=1 // pred_region
      %s45 = sadd.s32 0, 0
      %s46 = smul.u32 2, %s45
      %s48 = ssub.s32 256, 256
      %49 = vsyncadd [#allocation6], %s48
      %s50 = smul.addr %s46, 128
      %s51 = scalar_lea.hbm %s2, %s50
      %s52 = sshll.u32 [#allocation7], 4
      %s53 = int_to_ptr.vmem [resolvable:$true] %s52
      %58 = dma.hbm_to_vmem [thread:$0]  %s51, 256, %s53, [#allocation6], 128, 128, 8
    $region13: #{tpu_custom_call.1} parent=1 // pred_fallthru
      _
    // Predicated region
    $region14: #{tpu_custom_call.1} parent=1 // pred_check
      _
    $region15: #{tpu_custom_call.1} parent=1 // pred_check_branch
      %60 = sbr.rel (0) target = $region17
    $region16: #{tpu_custom_call.1} parent=1 // pred_region
      %61 = dma.done [#allocation3], 256
    $region17: #{tpu_custom_call.1} parent=1 // pred_fallthru
      _
    // Predicated region
    $region18: #{tpu_custom_call.1} parent=1 // pred_check
      _
    $region19: #{tpu_custom_call.1} parent=1 // pred_check_branch
      %63 = sbr.rel (0) target = $region21
    $region20: #{tpu_custom_call.1} parent=1 // pred_region
      %64 = dma.done [#allocation6], 256
    $region21: #{tpu_custom_call.1} parent=1 // pred_fallthru
      _
    // Predicated region
    $region22: #{tpu_custom_call.1} parent=1 // pred_check
      _
    $region23: #{tpu_custom_call.1} parent=1 // pred_check_branch
      %66 = sbr.rel (0) target = $region25
    $region24: #{tpu_custom_call.1} parent=1 // pred_region
      %67 = dma.done [#allocation6], 256
    $region25: #{tpu_custom_call.1} parent=1 // pred_fallthru
      _
    %s68 = sadd.s32 0, 0
    %s69 = smul.u32 2, %s68
    %s70 = sadd.s32 0, 0
    %s71 = smul.u32 2, %s70
    %s72 = sadd.s32 0, 0
    %s73 = smul.u32 2, %s72
    %p74 = scmp.eq.s32.totalorder 0, 0
    // Predicated region
    $region26: #{tpu_custom_call.1} parent=1 // pred_check
      %p75 = pneg %p74
    $region27: #{tpu_custom_call.1} parent=1 // pred_check_branch
      %77 = sbr.rel (%p75) target = $region29
    $region28: #{tpu_custom_call.1} parent=1 // pred_region
      %78 = vst [vmem:[#allocation8] sm:$0xff] 0.0
    $region29: #{tpu_custom_call.1} parent=1 // pred_fallthru
      _
    %v79 = vld [vmem:[#allocation2] sm:$0xff]
    %v80 = vld [vmem:[#allocation2 + $0x8] sm:$0xff]
    %v81 = vld [vmem:[#allocation5] sm:$0xff]
    %v82 = vld [vmem:[#allocation5 + $0x8] sm:$0xff]
    %v83 = vld [vmem:[#allocation7] sm:$0xff]
    %v84 = vld [vmem:[#allocation7 + $0x8] sm:$0xff]
    %v85 = vmul.f32 %v79, 1.6620499
    %v86 = vmul.f32 %v80, 1.6620499
    %v87 = vmax.f32 %v85, -60.0
    %v88 = vmax.f32 %v86, -60.0
    %v89 = vmin.f32 %v87, 60.0
    %v90 = vmin.f32 %v88, 60.0
    %v91 = vmul.f32 %v81, 0.002770083
    %v92 = vmul.f32 %v82, 0.002770083
    %v93 = vmax.f32 %v91, -60.0
    %v94 = vmax.f32 %v92, -60.0
    %v95 = vmin.f32 %v93, 60.0
    %v96 = vmin.f32 %v94, 60.0
    %v97 = vsub.f32 0.0, %v89
    %v98 = vsub.f32 0.0, %v90
    %v99 = vmul.f32 %v97, 1.442695
    %v100 = vpow.pop %v99
    %v101 = vmul.f32 %v98, 1.442695
    %v102 = vpow.pop %v101
    %v103 = vadd.f32 %v100, 1.0
    %v104 = vadd.f32 %v102, 1.0
    %v105 = vrcp.pop %v103
    %v106 = vmul.f32 1.0, %v105
    %v107 = vrcp.pop %v104
    %v108 = vmul.f32 1.0, %v107
    %v109 = vsub.f32 0.0, %v95
    %v110 = vsub.f32 0.0, %v96
    %v111 = vmul.f32 %v109, 1.442695
    %v112 = vpow.pop %v111
    %v113 = vmul.f32 %v110, 1.442695
    %v114 = vpow.pop %v113
    %v115 = vadd.f32 %v112, 1.0
    %v116 = vadd.f32 %v114, 1.0
    %v117 = vrcp.pop %v115
    %v118 = vmul.f32 1.0, %v117
    %v119 = vrcp.pop %v116
    %v120 = vmul.f32 1.0, %v119
    %v121 = vmul.f32 %v118, 0.75
    %v122 = vmul.f32 %v120, 0.75
    %v123 = vmul.f32 %v83, 0.25
    %v124 = vmul.f32 %v84, 0.25
    %v125 = vadd.f32 %v121, %v123
    %v126 = vadd.f32 %v122, %v124
    %v127 = vadd.f32 %v125, 1e-12
    %v128 = vadd.f32 %v126, 1e-12
    %v129 = vlog2.pop %v127
    %v130 = vmul.f32 %v129, 0.6931472
    %v131 = vlog2.pop %v128
    %v132 = vmul.f32 %v131, 0.6931472
    %v133 = vmul.f32 %v125, %v130
    %v134 = vmul.f32 %v126, %v132
    %v135 = vsub.f32 1.0, %v125
    %v136 = vsub.f32 1.0, %v126
    %v137 = vadd.f32 %v135, 1e-12
    %v138 = vadd.f32 %v136, 1e-12
    %v139 = vlog2.pop %v137
    %v140 = vmul.f32 %v139, 0.6931472
    %v141 = vlog2.pop %v138
    %v142 = vmul.f32 %v141, 0.6931472
    %v143 = vmul.f32 %v135, %v140
    %v144 = vmul.f32 %v136, %v142
    %v145 = vadd.f32 %v133, %v143
    %v146 = vadd.f32 %v134, %v144
    %v147 = vadd.f32 %v106, 1e-12
    %v148 = vadd.f32 %v108, 1e-12
    %v149 = vlog2.pop %v147
    %v150 = vmul.f32 %v149, 0.6931472
    %v151 = vlog2.pop %v148
    %v152 = vmul.f32 %v151, 0.6931472
    %v153 = vmul.f32 %v125, %v150
    %v154 = vmul.f32 %v126, %v152
    %v155 = vsub.f32 1.0, %v106
    %v156 = vsub.f32 1.0, %v108
    %v157 = vadd.f32 %v155, 1e-12
    %v158 = vadd.f32 %v156, 1e-12
    %v159 = vlog2.pop %v157
    %v160 = vmul.f32 %v159, 0.6931472
    %v161 = vlog2.pop %v158
    %v162 = vmul.f32 %v161, 0.6931472
    %v163 = vmul.f32 %v135, %v160
    %v164 = vmul.f32 %v136, %v162
    %v165 = vadd.f32 %v153, %v163
    %v166 = vadd.f32 %v154, %v164
    %v167 = vsub.f32 %v145, %v165
    %v168 = vsub.f32 %v146, %v166
    %v169 = vadd.f32 %v167, %v168
    %s170 = sadd.s32 0, 0
    %s171 = smul.u32 %s170, 2048
    %s172 = sadd.s32 %s171, 2048
    %p173 = scmp.le.s32.totalorder %s172, 2000
    // Predicated region
    $region30: #{tpu_custom_call.1} parent=1 // pred_check
      %p174 = pneg %p173
    $region31: #{tpu_custom_call.1} parent=1 // pred_check_branch
      %176 = sbr.rel (%p174) target = $region33
    $region32: #{tpu_custom_call.1} parent=1 // pred_region
      %v177 = vld [vmem:[#allocation8] sm:$0xff]
      %v178 = vadd.f32 %v177, %v169
      %179 = vst [vmem:[#allocation8] sm:$0xff] %v178
    $region33: #{tpu_custom_call.1} parent=1 // pred_fallthru
      _
    %p180 = scmp.gt.s32.totalorder %s172, 2000
    // Predicated region
    $region34: #{tpu_custom_call.1} parent=1 // pred_check
      %p181 = pneg %p180
    $region35: #{tpu_custom_call.1} parent=1 // pred_check_branch
      %183 = sbr.rel (%p181) target = $region37
    $region36: #{tpu_custom_call.1} parent=1 // pred_region
      %v184 = vlaneseq
      %v185 = vshrl.u32 %v184, 7
      %v186 = vadd.s32 %v185, 8
      %v187 = vlaneseq
      %v188 = vand.u32 %v187, 127
      %v189 = vmul.u32 %v185, 128
      %v190 = vmul.u32 %v186, 128
      %v191 = vstv %s171
      %v192 = vadd.s32 %v191, %v189
      %v193 = vadd.s32 %v191, %v190
      %v194 = vadd.s32 %v192, %v188
      %v195 = vadd.s32 %v193, %v188
      %vm196 = vcmp.lt.s32.totalorder %v194, 2000
      %vm197 = vcmp.lt.s32.totalorder %v195, 2000
      %v198 = vsel %vm196, %v167, 0.0
      %v199 = vsel %vm197, %v168, 0.0
      %v200 = vld [vmem:[#allocation8] sm:$0xff]
      %v201 = vadd.f32 %v198, %v199
      %v202 = vadd.f32 %v200, %v201
      %203 = vst [vmem:[#allocation8] sm:$0xff] %v202
    $region37: #{tpu_custom_call.1} parent=1 // pred_fallthru
      _
    // Predicated region
    $region38: #{tpu_custom_call.1} parent=1 // pred_check
      _
    $region39: #{tpu_custom_call.1} parent=1 // pred_check_branch
      %205 = sbr.rel (0) target = $region41
    $region40: #{tpu_custom_call.1} parent=1 // pred_region
      %s207 = ssub.s32 128, 128
      %208 = vsyncadd [#allocation4], %s207
      %s210 = sshll.u32 [#allocation8], 4
      %s211 = int_to_ptr.vmem [resolvable:$true] %s210
      %213 = dma.vmem_to_hbm [thread:$0]  %s211, 128, %s3, [#allocation4]
    $region41: #{tpu_custom_call.1} parent=1 // pred_fallthru
      _
    // Predicated region
    $region42: #{tpu_custom_call.1} parent=1 // pred_check
      _
    $region43: #{tpu_custom_call.1} parent=1 // pred_check_branch
      %215 = sbr.rel (0) target = $region45
    $region44: #{tpu_custom_call.1} parent=1 // pred_region
      %216 = dma.done [#allocation4], 128
    $region45: #{tpu_custom_call.1} parent=1 // pred_fallthru
      _
    %217 = vsyncpa [#allocation3], 1
    %218 = vsyncpa [#allocation6], 1
    %219 = vsyncpa [#allocation4], 1

</llo_original>
